<compile_context>
chip_gen: v7x
topology: tpu7x:2x2x1
jax: 0.10.0
libtpu: 0.0.40
codegen_flags: <defaults>
</compile_context>

<pallas_src>
import functools

import jax
import jax.numpy as jnp
from jax.experimental import pallas as pl
from jax.experimental.pallas import tpu as pltpu


def _conv_stats_kernel(x_ref, w_ref, s1_ref, s2_ref):
    # x_ref: (K, TM) patch columns, w_ref: (Cout, K) folded conv weight.
    # Outputs: per-tile partial sums for the BatchNorm statistics.
    y = jnp.dot(w_ref[...], x_ref[...], preferred_element_type=jnp.float32)  # (Cout, TM) f32
    s1_ref[...] = jnp.sum(y, axis=1, keepdims=True)[None]        # (1, Cout, 1)
    s2_ref[...] = jnp.sum(y * y, axis=1, keepdims=True)[None]    # (1, Cout, 1)


def _conv_norm_kernel(x_ref, w_ref, scale_ref, shift_ref, o_ref):
    # Recompute the tile matmul (equal HBM traffic to storing/reloading y in bf16 mode)
    # and apply the pre-folded BN as a single FMA per element.
    y = jnp.dot(w_ref[...], x_ref[...], preferred_element_type=jnp.float32)  # (Cout, TM)
    o_ref[...] = (y * scale_ref[...] + shift_ref[...]).astype(o_ref.dtype)


@functools.partial(jax.jit, static_argnames=("eps", "tile_m", "compute_dtype"))
def basic_convolution_block_down(x, weight, gamma, beta, eps=1e-5, *,
                                 tile_m=512, compute_dtype=jnp.bfloat16):
    """x: (N, C_in, D, H, W) float32 (NCDHW); weight: (C_out, C_in, 2, 2, 2)."""
    N, C_in, D, H, W = x.shape
    C_out = weight.shape[0]
    Do, Ho, Wo = D // 2, H // 2, W // 2
    K = C_in * 8
    M = N * Do * Ho * Wo

    # --- host glue: patch matrix (K, M), channel/tap-major rows, point-major columns.
    # XLA fuses reshape + transpose + dtype-convert into one pass over x.
    xp = x.reshape(N, C_in, Do, 2, Ho, 2, Wo, 2)
    xp = xp.transpose(1, 3, 5, 7, 0, 2, 4, 6).reshape(K, M).astype(compute_dtype)

    num_tiles = -(-M // tile_m)
    Mp = num_tiles * tile_m
    if Mp != M:
        # Zero columns contribute zeros to sum / sum-of-squares -> stats unaffected.
        xp = jnp.pad(xp, ((0, 0), (0, Mp - M)))

    wf = weight.reshape(C_out, K).astype(compute_dtype)          # (Cout, K), matches xp row order

    x_spec = pl.BlockSpec((K, tile_m), lambda i: (0, i))
    w_spec = pl.BlockSpec((C_out, K), lambda i: (0, 0))
    stat_spec = pl.BlockSpec((1, C_out, 1), lambda i: (i, 0, 0))
    vec_spec = pl.BlockSpec((C_out, 1), lambda i: (0, 0))
    out_spec = pl.BlockSpec((C_out, tile_m), lambda i: (0, i))

    compiler_params = pltpu.CompilerParams(
        dimension_semantics=("parallel",),          # shards M across TCs on v7x
        vmem_limit_bytes=32 * 1024 * 1024,
    )

    itemsize = jnp.dtype(compute_dtype).itemsize
    flops = 2 * Mp * K * C_out
    x_bytes = Mp * K * itemsize + C_out * K * itemsize

    # --- pass 1: conv matmul + per-tile partial BN statistics -----------------------
    s1, s2 = pl.pallas_call(
        _conv_stats_kernel,
        out_shape=(
            jax.ShapeDtypeStruct((num_tiles, C_out, 1), jnp.float32),
            jax.ShapeDtypeStruct((num_tiles, C_out, 1), jnp.float32),
        ),
        grid=(num_tiles,),
        in_specs=[x_spec, w_spec],
        out_specs=(stat_spec, stat_spec),
        compiler_params=compiler_params,
        cost_estimate=pl.CostEstimate(
            flops=flops, transcendentals=0,
            bytes_accessed=x_bytes + 2 * num_tiles * C_out * 4),
    )(xp, wf)

    # --- tiny host finalize: fold batch stats + gamma/beta into scale/shift ---------
    s1_tot = jnp.sum(s1, axis=0)[:, 0]                           # (Cout,)
    s2_tot = jnp.sum(s2, axis=0)[:, 0]
    mean = s1_tot / M
    var = jnp.maximum(s2_tot / M - mean * mean, 0.0)             # biased batch variance
    inv = jax.lax.rsqrt(var + eps)
    scale = (gamma * inv).astype(jnp.float32).reshape(C_out, 1)
    shift = (beta - mean * gamma * inv).astype(jnp.float32).reshape(C_out, 1)

    # --- pass 2: conv matmul + fused normalize (one FMA per element) ----------------
    out = pl.pallas_call(
        _conv_norm_kernel,
        out_shape=jax.ShapeDtypeStruct((C_out, Mp), jnp.float32),
        grid=(num_tiles,),
        in_specs=[x_spec, w_spec, vec_spec, vec_spec],
        out_specs=out_spec,
        compiler_params=compiler_params,
        cost_estimate=pl.CostEstimate(
            flops=flops + 2 * Mp * C_out, transcendentals=0,
            bytes_accessed=x_bytes + Mp * C_out * 4),
    )(xp, wf, scale, shift)

    # Back to PyTorch NCDHW output convention.
    out = out[:, :M].reshape(C_out, N, Do, Ho, Wo).transpose(1, 0, 2, 3, 4)
    return out


def _reference(x, weight, gamma, beta, eps=1e-5):
    # Pure-JAX reference: conv3d (ks=2, stride=2, no bias) + training-mode BN.
    y = jax.lax.conv_general_dilated(
        x, weight, window_strides=(2, 2, 2), padding="VALID",
        dimension_numbers=("NCDHW", "OIDHW", "NCDHW"))
    mean = jnp.mean(y, axis=(0, 2, 3, 4), keepdims=True)
    var = jnp.mean((y - mean) ** 2, axis=(0, 2, 3, 4), keepdims=True)
    g = gamma.reshape(1, -1, 1, 1, 1)
    b = beta.reshape(1, -1, 1, 1, 1)
    return (y - mean) * jax.lax.rsqrt(var + eps) * g + b


if __name__ == "__main__":
    inc, outc, ks = 4, 8, 2
    N, Dsp = 2, 16

    key = jax.random.PRNGKey(0)
    kx, kw, kg, kb = jax.random.split(key, 4)
    x = jax.random.normal(kx, (N, inc, Dsp, Dsp, Dsp), dtype=jnp.float32)
    weight = jax.random.normal(kw, (outc, inc, ks, ks, ks), dtype=jnp.float32) * 0.1
    gamma = 1.0 + 0.1 * jax.random.normal(kg, (outc,), dtype=jnp.float32)
    beta = 0.1 * jax.random.normal(kb, (outc,), dtype=jnp.float32)

    ref = jax.block_until_ready(_reference(x, weight, gamma, beta))

    # Exact-semantics path (f32 MXU feed): tight tolerance.
    out_f32 = jax.block_until_ready(
        basic_convolution_block_down(x, weight, gamma, beta, compute_dtype=jnp.float32))
    assert out_f32.shape == (N, outc, Dsp // 2, Dsp // 2, Dsp // 2), out_f32.shape
    err_f32 = float(jnp.max(jnp.abs(out_f32 - ref)))
    assert err_f32 < 1e-4, f"f32 path error {err_f32}"

    # Fast path (bf16 MXU feed, f32 accumulation + f32 BN math): bf16-level tolerance.
    out_bf16 = jax.block_until_ready(
        basic_convolution_block_down(x, weight, gamma, beta, compute_dtype=jnp.bfloat16))
    err_bf16 = float(jnp.max(jnp.abs(out_bf16 - ref)))
    assert err_bf16 < 5e-2, f"bf16 path error {err_bf16}"

    print("KERNEL_OK")
</pallas_src>

<mosaic_0001>
module attributes {stable_mosaic.version = 11 : i64} {
  func.func @_conv_stats_kernel(%arg0: i32, %arg1: memref<32x512xf32, #tpu.memory_space<vmem>>, %arg2: memref<8x32xf32, #tpu.memory_space<vmem>>, %arg3: memref<1x8x1xf32, #tpu.memory_space<vmem>>, %arg4: memref<1x8x1xf32, #tpu.memory_space<vmem>>) attributes {dimension_semantics = [#tpu.dimension_semantics<parallel>], iteration_bounds = array<i64: 2>, scalar_prefetch = 0 : i64, scratch_operands = 0 : i64, tpu.core_type = #tpu.core_type<tc>, window_params = [{transform_indices = @transform_0, window_bounds = array<i64: 32, 512>}, {pipeline_mode = #tpu.pipeline_mode<synchronous>, transform_indices = @transform_1, window_bounds = array<i64: 8, 32>}, {transform_indices = @transform_2, window_bounds = array<i64: 1, 8, 1>}, {transform_indices = @transform_3, window_bounds = array<i64: 1, 8, 1>}]} {
    %c0 = arith.constant 0 : index
    %c0_0 = arith.constant 0 : index
    %0 = vector.load %arg2[%c0, %c0_0] : memref<8x32xf32, #tpu.memory_space<vmem>>, vector<8x32xf32>
    %c0_1 = arith.constant 0 : index
    %c0_2 = arith.constant 0 : index
    %1 = vector.load %arg1[%c0_1, %c0_2] : memref<32x512xf32, #tpu.memory_space<vmem>>, vector<32x512xf32>
    %cst = arith.constant dense<0.000000e+00> : vector<8x512xf32>
    %2 = tpu.matmul %0, %1, %cst {dimension_numbers = #tpu.dot_dimension_numbers<[1], [0], [0], [1], [0, 0, 1, 1], [], []>} : vector<8x32xf32>, vector<32x512xf32>, vector<8x512xf32> -> vector<8x512xf32>
    %cst_3 = arith.constant dense<0.000000e+00> : vector<8xf32>
    %3 = vector.multi_reduction <add>, %2, %cst_3 [1] : vector<8x512xf32> to vector<8xf32>
    %4 = vector.shape_cast %3 : vector<8xf32> to vector<8x1xf32>
    %5 = vector.shape_cast %4 : vector<8x1xf32> to vector<1x8x1xf32>
    %c0_4 = arith.constant 0 : index
    %c0_5 = arith.constant 0 : index
    %c0_6 = arith.constant 0 : index
    %6 = vector.load %arg3[%c0_4, %c0_5, %c0_6] : memref<1x8x1xf32, #tpu.memory_space<vmem>>, vector<1x8x1xf32>
    tpu.vector_store %arg3[%c0_4, %c0_5, %c0_6], %5 {strides = array<i32>} : memref<1x8x1xf32, #tpu.memory_space<vmem>>, vector<1x8x1xf32>,
    %7 = arith.mulf %2, %2 : vector<8x512xf32>
    %cst_7 = arith.constant dense<0.000000e+00> : vector<8xf32>
    %8 = vector.multi_reduction <add>, %7, %cst_7 [1] : vector<8x512xf32> to vector<8xf32>
    %9 = vector.shape_cast %8 : vector<8xf32> to vector<8x1xf32>
    %10 = vector.shape_cast %9 : vector<8x1xf32> to vector<1x8x1xf32>
    %c0_8 = arith.constant 0 : index
    %c0_9 = arith.constant 0 : index
    %c0_10 = arith.constant 0 : index
    %11 = vector.load %arg4[%c0_8, %c0_9, %c0_10] : memref<1x8x1xf32, #tpu.memory_space<vmem>>, vector<1x8x1xf32>
    tpu.vector_store %arg4[%c0_8, %c0_9, %c0_10], %10 {strides = array<i32>} : memref<1x8x1xf32, #tpu.memory_space<vmem>>, vector<1x8x1xf32>,
    return
  }
  func.func @transform_0(%arg0: i32) -> (i32, i32) {
    %c0_i32 = arith.constant 0 : i32
    %c0_i32_0 = arith.constant 0 : i32
    return %c0_i32, %arg0 : i32, i32
  }
  func.func @transform_1(%arg0: i32) -> (i32, i32) {
    %c0_i32 = arith.constant 0 : i32
    %c0_i32_0 = arith.constant 0 : i32
    %c0_i32_1 = arith.constant 0 : i32
    return %c0_i32, %c0_i32_0 : i32, i32
  }
  func.func @transform_2(%arg0: i32) -> (i32, i32, i32) {
    %c0_i32 = arith.constant 0 : i32
    %c0_i32_0 = arith.constant 0 : i32
    %c0_i32_1 = arith.constant 0 : i32
    return %arg0, %c0_i32, %c0_i32_0 : i32, i32, i32
  }
  func.func @transform_3(%arg0: i32) -> (i32, i32, i32) {
    %c0_i32 = arith.constant 0 : i32
    %c0_i32_0 = arith.constant 0 : i32
    %c0_i32_1 = arith.constant 0 : i32
    return %arg0, %c0_i32, %c0_i32_0 : i32, i32, i32
  }
}

module attributes {stable_mosaic.version = 11 : i64} {
  func.func @_conv_norm_kernel(%arg0: i32, %arg1: memref<32x512xf32, #tpu.memory_space<vmem>>, %arg2: memref<8x32xf32, #tpu.memory_space<vmem>>, %arg3: memref<8x1xf32, #tpu.memory_space<vmem>>, %arg4: memref<8x1xf32, #tpu.memory_space<vmem>>, %arg5: memref<8x512xf32, #tpu.memory_space<vmem>>) attributes {dimension_semantics = [#tpu.dimension_semantics<parallel>], iteration_bounds = array<i64: 2>, scalar_prefetch = 0 : i64, scratch_operands = 0 : i64, tpu.core_type = #tpu.core_type<tc>, window_params = [{transform_indices = @transform_0, window_bounds = array<i64: 32, 512>}, {pipeline_mode = #tpu.pipeline_mode<synchronous>, transform_indices = @transform_1, window_bounds = array<i64: 8, 32>}, {pipeline_mode = #tpu.pipeline_mode<synchronous>, transform_indices = @transform_2, window_bounds = array<i64: 8, 1>}, {pipeline_mode = #tpu.pipeline_mode<synchronous>, transform_indices = @transform_3, window_bounds = array<i64: 8, 1>}, {transform_indices = @transform_4, window_bounds = array<i64: 8, 512>}]} {
    %c0 = arith.constant 0 : index
    %c0_0 = arith.constant 0 : index
    %0 = vector.load %arg2[%c0, %c0_0] : memref<8x32xf32, #tpu.memory_space<vmem>>, vector<8x32xf32>
    %c0_1 = arith.constant 0 : index
    %c0_2 = arith.constant 0 : index
    %1 = vector.load %arg1[%c0_1, %c0_2] : memref<32x512xf32, #tpu.memory_space<vmem>>, vector<32x512xf32>
    %cst = arith.constant dense<0.000000e+00> : vector<8x512xf32>
    %2 = tpu.matmul %0, %1, %cst {dimension_numbers = #tpu.dot_dimension_numbers<[1], [0], [0], [1], [0, 0, 1, 1], [], []>} : vector<8x32xf32>, vector<32x512xf32>, vector<8x512xf32> -> vector<8x512xf32>
    %c0_3 = arith.constant 0 : index
    %c0_4 = arith.constant 0 : index
    %3 = vector.load %arg3[%c0_3, %c0_4] : memref<8x1xf32, #tpu.memory_space<vmem>>, vector<8x1xf32>
    %4 = vector.broadcast %3 : vector<8x1xf32> to vector<8x512xf32>
    %5 = arith.mulf %2, %4 : vector<8x512xf32>
    %c0_5 = arith.constant 0 : index
    %c0_6 = arith.constant 0 : index
    %6 = vector.load %arg4[%c0_5, %c0_6] : memref<8x1xf32, #tpu.memory_space<vmem>>, vector<8x1xf32>
    %7 = vector.broadcast %6 : vector<8x1xf32> to vector<8x512xf32>
    %8 = arith.addf %5, %7 : vector<8x512xf32>
    %c0_7 = arith.constant 0 : index
    %c0_8 = arith.constant 0 : index
    %9 = vector.load %arg5[%c0_7, %c0_8] : memref<8x512xf32, #tpu.memory_space<vmem>>, vector<8x512xf32>
    tpu.vector_store %arg5[%c0_7, %c0_8], %8 {strides = array<i32>} : memref<8x512xf32, #tpu.memory_space<vmem>>, vector<8x512xf32>,
    return
  }
  func.func @transform_0(%arg0: i32) -> (i32, i32) {
    %c0_i32 = arith.constant 0 : i32
    %c0_i32_0 = arith.constant 0 : i32
    return %c0_i32, %arg0 : i32, i32
  }
  func.func @transform_1(%arg0: i32) -> (i32, i32) {
    %c0_i32 = arith.constant 0 : i32
    %c0_i32_0 = arith.constant 0 : i32
    %c0_i32_1 = arith.constant 0 : i32
    return %c0_i32, %c0_i32_0 : i32, i32
  }
  func.func @transform_2(%arg0: i32) -> (i32, i32) {
    %c0_i32 = arith.constant 0 : i32
    %c0_i32_0 = arith.constant 0 : i32
    %c0_i32_1 = arith.constant 0 : i32
    return %c0_i32, %c0_i32_0 : i32, i32
  }
  func.func @transform_3(%arg0: i32) -> (i32, i32) {
    %c0_i32 = arith.constant 0 : i32
    %c0_i32_0 = arith.constant 0 : i32
    %c0_i32_1 = arith.constant 0 : i32
    return %c0_i32, %c0_i32_0 : i32, i32
  }
  func.func @transform_4(%arg0: i32) -> (i32, i32) {
    %c0_i32 = arith.constant 0 : i32
    %c0_i32_0 = arith.constant 0 : i32
    return %c0_i32, %arg0 : i32, i32
  }
}

</mosaic_0001>

<llo_original>
// kernel: basic_convolution_block_down.2
$region0: #{basic_convolution_block_down.2}
  #allocation0 [shape = 'u32[]', space=smem, size = 0x4, offset = 0x4, fixed_abs, tag = 'smem constant byte address 0x4 - core index']
  #allocation1 [shape = 'u32[144,128]{1,0:T(1,128)}', space=vmem, size = 0x12000, scoped, tag = 'internal scratch']
  %s0 = inlined_call_operand.vmem [shape: f32[32,1024], index: 0, kind: input, shape index: {}]
  %s1 = inlined_call_operand.vmem [shape: f32[8,32], index: 1, kind: input, shape index: {}]
  %s2 = inlined_call_operand.vmem [shape: f32[2,8,1], index: 2, kind: output, shape index: {0}]
  %s3 = inlined_call_operand.vmem [shape: f32[2,8,1], index: 3, kind: output, shape index: {1}]
  %4 = xla_tuple %s2, %s3
  %s5 = sld [smem:[#allocation0]]
  $region72: #{basic_convolution_block_down.2} parent=0
    _
  %s7 = ssub.s32 1, %s5
  %s8 = scalar_select 0, %s7, %s5
  $region1: #{basic_convolution_block_down.2} parent=0
    #allocation2 [shape = 'u8[131072]{0}', space=vmem, size = 0x20000, scoped, tag = 'input window, operand 0']
    loop: start=0, step=1, limit=4
    $region2: #{basic_convolution_block_down.2} parent=1 // loop_pre_header
      _
    $region3: #{basic_convolution_block_down.2} parent=1 // loop_header
      %s10 = sphi 0, %s14
      %p11 = scmp.ge.s32.totalorder %s10, 4
      %s20 = sphi 0, %s22
      %s23 = sphi 0, %s20
      %s24 = sphi 0, %s23
      %s40 = sphi 0, %s24
      %s44 = sphi 0, %s44
      %s46 = sphi 0, %s44
      %s47 = sphi 0, %s46
      %s61 = sphi 0, %s47
      %s67 = sphi 0, %s69
      %s70 = sphi 0, %s67
      %s71 = sphi 0, %s70
      %s87 = sphi 0, %s71
      %s93 = sphi 0, %s95
      %s96 = sphi 0, %s93
      %s97 = sphi 0, %s96
      %s113 = sphi 0, %s97
    $region4: #{basic_convolution_block_down.2} parent=1 // loop_header_branch
      %13 = sbr.rel (%p11) target = $region8
    $region5: #{basic_convolution_block_down.2} parent=1 // loop_body
      %s15 = ssub.s32 %s10, 1
      %s16 = ssub.s32 %s10, 2
      %s17 = sadd.s32 %s10, 1
      %s18 = ssub.s32 %s10, %s17
      %p19 = scmp.eq.s32.totalorder %s18, 0
      %s21 = sadd.s32 %s20, 1
      %s22 = scalar_select %p19, %s20, %s21
      %p25 = pneg %p19
      %p26 = scmp.eq.s32.totalorder %s10, 1
      %p27 = por %p25, %p26
      %p28 = scmp.ne.s32.totalorder %s20, %s23
      %p29 = scmp.eq.s32.totalorder %s10, 0
      %p30 = por %p28, %p29
      %p31 = scmp.ne.s32.totalorder %s20, %s23
      %p32 = scmp.eq.s32.totalorder %s15, 1
      %p33 = por %p31, %p32
      %p34 = scmp.ne.s32.totalorder %s23, %s24
      %p35 = scmp.eq.s32.totalorder %s15, 0
      %p36 = por %p34, %p35
      %p37 = scmp.ne.s32.totalorder %s23, %s24
      %p38 = scmp.eq.s32.totalorder %s16, 1
      %p39 = por %p37, %p38
      %p41 = scmp.ne.s32.totalorder %s24, %s40
      %p42 = scmp.eq.s32.totalorder %s16, 0
      %p43 = por %p41, %p42
      %s45 = sadd.s32 %s44, 1
      %p48 = scmp.eq.s32.totalorder %s10, 1
      %p49 = scmp.ne.s32.totalorder %s44, %s46
      %p50 = scmp.eq.s32.totalorder %s10, 0
      %p51 = por %p49, %p50
      %p52 = scmp.ne.s32.totalorder %s44, %s46
      %p53 = scmp.eq.s32.totalorder %s15, 1
      %p54 = por %p52, %p53
      %p55 = scmp.ne.s32.totalorder %s46, %s47
      %p56 = scmp.eq.s32.totalorder %s15, 0
      %p57 = por %p55, %p56
      %p58 = scmp.ne.s32.totalorder %s46, %s47
      %p59 = scmp.eq.s32.totalorder %s16, 1
      %p60 = por %p58, %p59
      %p62 = scmp.ne.s32.totalorder %s47, %s61
      %p63 = scmp.eq.s32.totalorder %s16, 0
      %p64 = por %p62, %p63
      %s65 = ssub.s32 %s10, %s17
      %p66 = scmp.eq.s32.totalorder %s65, 0
      %s68 = sadd.s32 %s67, 1
      %s69 = scalar_select %p66, %s67, %s68
      %p72 = pneg %p66
      %p73 = scmp.eq.s32.totalorder %s10, 1
      %p74 = por %p72, %p73
      %p75 = scmp.ne.s32.totalorder %s67, %s70
      %p76 = scmp.eq.s32.totalorder %s10, 0
      %p77 = por %p75, %p76
      %p78 = scmp.ne.s32.totalorder %s67, %s70
      %p79 = scmp.eq.s32.totalorder %s15, 1
      %p80 = por %p78, %p79
      %p81 = scmp.ne.s32.totalorder %s70, %s71
      %p82 = scmp.eq.s32.totalorder %s15, 0
      %p83 = por %p81, %p82
      %p84 = scmp.ne.s32.totalorder %s70, %s71
      %p85 = scmp.eq.s32.totalorder %s16, 1
      %p86 = por %p84, %p85
      %p88 = scmp.ne.s32.totalorder %s71, %s87
      %p89 = scmp.eq.s32.totalorder %s16, 0
      %p90 = por %p88, %p89
      %s91 = ssub.s32 %s10, %s17
      %p92 = scmp.eq.s32.totalorder %s91, 0
      %s94 = sadd.s32 %s93, 1
      %s95 = scalar_select %p92, %s93, %s94
      %p98 = pneg %p92
      %p99 = scmp.eq.s32.totalorder %s10, 1
      %p100 = por %p98, %p99
      %p101 = scmp.ne.s32.totalorder %s93, %s96
      %p102 = scmp.eq.s32.totalorder %s10, 0
      %p103 = por %p101, %p102
      %p104 = scmp.ne.s32.totalorder %s93, %s96
      %p105 = scmp.eq.s32.totalorder %s15, 1
      %p106 = por %p104, %p105
      %p107 = scmp.ne.s32.totalorder %s96, %s97
      %p108 = scmp.eq.s32.totalorder %s15, 0
      %p109 = por %p107, %p108
      %p110 = scmp.ne.s32.totalorder %s96, %s97
      %p111 = scmp.eq.s32.totalorder %s16, 1
      %p112 = por %p110, %p111
      %p114 = scmp.ne.s32.totalorder %s97, %s113
      %p115 = scmp.eq.s32.totalorder %s16, 0
      %p116 = por %p114, %p115
      %p117 = scmp.le.s32.totalorder 1, %s10
      %p118 = scmp.lt.s32.totalorder %s10, 3
      %p119 = pnand %p117, %p118
      %p120 = pneg %p119
      // Predicated region
      $region9: #{basic_convolution_block_down.2} parent=5 // pred_check
        _
      $region10: #{basic_convolution_block_down.2} parent=5 // pred_check_branch
        %122 = sbr.rel (%p119) target = $region12
      $region11: #{basic_convolution_block_down.2} parent=5 // pred_region
        %s123 = ssub.s32 %s10, 1
        // Predicated region
        $region13: #{basic_convolution_block_down.2} parent=11 // pred_check
          %p124 = pneg %p57
        $region14: #{basic_convolution_block_down.2} parent=11 // pred_check_branch
          %126 = sbr.rel (%p124) target = $region16
        $region15: #{basic_convolution_block_down.2} parent=11 // pred_region
          _
        $region16: #{basic_convolution_block_down.2} parent=11 // pred_fallthru
          _
      $region12: #{basic_convolution_block_down.2} parent=5 // pred_fallthru
        _
      %p127 = scmp.lt.s32.totalorder %s10, 2
      // Predicated region
      $region17: #{basic_convolution_block_down.2} parent=5 // pred_check
        %p128 = pneg %p127
      $region18: #{basic_convolution_block_down.2} parent=5 // pred_check_branch
        %130 = sbr.rel (%p128) target = $region20
      $region19: #{basic_convolution_block_down.2} parent=5 // pred_region
        // Predicated region
        $region21: #{basic_convolution_block_down.2} parent=19 // pred_check
          %p131 = pneg %p30
        $region22: #{basic_convolution_block_down.2} parent=19 // pred_check_branch
          %133 = sbr.rel (%p131) target = $region24
        $region23: #{basic_convolution_block_down.2} parent=19 // pred_region
          %s134 = sand.u32 %s20, 1
          %s135 = sand.u32 %s20, 1
          %s136 = smul.addr %s135, 128
          %s137 = scalar_lea.vmem [#allocation2], %s136
          %s138 = smul.u32 4, %s10
          %s139 = smul.addr %s138, 8
          %s140 = scalar_lea.vmem %s0, %s139
          // Predicated region
          $region25: #{basic_convolution_block_down.2} parent=23 // pred_check
            _
          $region26: #{basic_convolution_block_down.2} parent=23 // pred_check_branch
            %142 = sbr.rel (0) target = $region28
          $region27: #{basic_convolution_block_down.2} parent=23 // pred_region
            // Predicated region
            $region29: #{basic_convolution_block_down.2} parent=27 // pred_check
              _
            $region30: #{basic_convolution_block_down.2} parent=27 // pred_check_branch
              %144 = sbr.rel (0) target = $region32
            $region31: #{basic_convolution_block_down.2} parent=27 // pred_region
              loop: start=0, step=1, limit=1
              $region33: #{basic_convolution_block_down.2} parent=31 // loop_pre_header
                _
              $region34: #{basic_convolution_block_down.2} parent=31 // loop_header
                %s146 = sphi 0, %s150
                %p147 = scmp.ge.s32.totalorder %s146, 1
                %s151 = sphi %s140, %s140
                %s152 = sphi %s137, %s137
              $region35: #{basic_convolution_block_down.2} parent=31 // loop_header_branch
                %149 = sbr.rel (%p147) target = $region39
              $region36: #{basic_convolution_block_down.2} parent=31 // loop_body
                %v153 = vld [vmem:[%s151] sm:$0xff]
                %154 = vst [vmem:[%s152] sm:$0xff] %v153
                %v155 = vld [vmem:[%s151 + $0x8] sm:$0xff]
                %156 = vst [vmem:[%s152 + $0x8] sm:$0xff] %v155
                %v157 = vld [vmem:[%s151 + $0x10] sm:$0xff]
                %158 = vst [vmem:[%s152 + $0x10] sm:$0xff] %v157
                %v159 = vld [vmem:[%s151 + $0x18] sm:$0xff]
                %160 = vst [vmem:[%s152 + $0x18] sm:$0xff] %v159
                %v161 = vld [vmem:[%s151 + $0x40] sm:$0xff]
                %162 = vst [vmem:[%s152 + $0x20] sm:$0xff] %v161
                %v163 = vld [vmem:[%s151 + $0x48] sm:$0xff]
                %164 = vst [vmem:[%s152 + $0x28] sm:$0xff] %v163
                %v165 = vld [vmem:[%s151 + $0x50] sm:$0xff]
                %166 = vst [vmem:[%s152 + $0x30] sm:$0xff] %v165
                %v167 = vld [vmem:[%s151 + $0x58] sm:$0xff]
                %168 = vst [vmem:[%s152 + $0x38] sm:$0xff] %v167
                %v169 = vld [vmem:[%s151 + $0x80] sm:$0xff]
                %170 = vst [vmem:[%s152 + $0x40] sm:$0xff] %v169
                %v171 = vld [vmem:[%s151 + $0x88] sm:$0xff]
                %172 = vst [vmem:[%s152 + $0x48] sm:$0xff] %v171
                %v173 = vld [vmem:[%s151 + $0x90] sm:$0xff]
                %174 = vst [vmem:[%s152 + $0x50] sm:$0xff] %v173
                %v175 = vld [vmem:[%s151 + $0x98] sm:$0xff]
                %176 = vst [vmem:[%s152 + $0x58] sm:$0xff] %v175
                %v177 = vld [vmem:[%s151 + $0xc0] sm:$0xff]
                %178 = vst [vmem:[%s152 + $0x60] sm:$0xff] %v177
                %v179 = vld [vmem:[%s151 + $0xc8] sm:$0xff]
                %180 = vst [vmem:[%s152 + $0x68] sm:$0xff] %v179
                %v181 = vld [vmem:[%s151 + $0xd0] sm:$0xff]
                %182 = vst [vmem:[%s152 + $0x70] sm:$0xff] %v181
                %v183 = vld [vmem:[%s151 + $0xd8] sm:$0xff]
                %184 = vst [vmem:[%s152 + $0x78] sm:$0xff] %v183
              $region37: #{basic_convolution_block_down.2} parent=31 // loop_footer
                %s150 = sadd.s32 1, %s146
              $region38: #{basic_convolution_block_down.2} parent=31 // loop_footer_branch
                %145 = sbr.rel target = $region34
              $region39: #{basic_convolution_block_down.2} parent=31 // loop_exit
                _
            $region32: #{basic_convolution_block_down.2} parent=27 // pred_fallthru
              _
            // Predicated region
            $region40: #{basic_convolution_block_down.2} parent=27 // pred_check
              _
            $region41: #{basic_convolution_block_down.2} parent=27 // pred_check_branch
              %186 = sbr.rel target = $region43
            $region42: #{basic_convolution_block_down.2} parent=27 // pred_region
              _
            $region43: #{basic_convolution_block_down.2} parent=27 // pred_fallthru
              _
          $region28: #{basic_convolution_block_down.2} parent=23 // pred_fallthru
            _
          %187 = vnop
        $region24: #{basic_convolution_block_down.2} parent=19 // pred_fallthru
          _
      $region20: #{basic_convolution_block_down.2} parent=5 // pred_fallthru
        _
      %p188 = scmp.le.s32.totalorder 1, %s10
      %p189 = scmp.lt.s32.totalorder %s10, 3
      %p190 = pnand %p188, %p189
      %p191 = pneg %p190
      // Predicated region
      $region44: #{basic_convolution_block_down.2} parent=5 // pred_check
        _
      $region45: #{basic_convolution_block_down.2} parent=5 // pred_check_branch
        %193 = sbr.rel (%p190) target = $region47
      $region46: #{basic_convolution_block_down.2} parent=5 // pred_region
        %s194 = ssub.s32 %s10, 1
        %s195 = sand.u32 %s23, 1
        %s196 = sand.u32 %s23, 1
        %s197 = smul.addr %s196, 128
        %s198 = scalar_lea.vmem [#allocation2], %s197
        // Predicated region
        $region48: #{basic_convolution_block_down.2} parent=46 // pred_check
          %p199 = pneg %p36
        $region49: #{basic_convolution_block_down.2} parent=46 // pred_check_branch
          %201 = sbr.rel (%p199) target = $region51
        $region50: #{basic_convolution_block_down.2} parent=46 // pred_region
          _
        $region51: #{basic_convolution_block_down.2} parent=46 // pred_fallthru
          _
        %s202 = sand.u32 %s23, 1
        %s203 = sand.u32 %s23, 1
        %s204 = smul.addr %s203, 128
        %s205 = scalar_lea.vmem [#allocation2], %s204
        %p206 = pneg %p36
        %p207 = pneg %p33
        %p208 = pneg %p57
        %p209 = pneg %p54
        %p210 = pneg %p83
        %p211 = pneg %p80
        %p212 = scmp.lt.s32.totalorder %s15, 1
        %s213 = scalar_select %p212, %s15, 1
        %s214 = smul.addr %s213, 8
        %s215 = scalar_lea.vmem %s2, %s214
        %p216 = pneg %p109
        %p217 = pneg %p106
        %p218 = scmp.lt.s32.totalorder %s15, 1
        %s219 = scalar_select %p218, %s15, 1
        %s220 = smul.addr %s219, 8
        %s221 = scalar_lea.vmem %s3, %s220
        %s222 = smul.u32 4, %s15
        %p223 = scmp.lt.s32.totalorder %s15, 1
        %s224 = scalar_select %p223, %s15, 1
        %s225 = smul.addr %s224, 8
        %s226 = scalar_lea.vmem %s2, %s225
        %p227 = scmp.lt.s32.totalorder %s15, 1
        %s228 = scalar_select %p227, %s15, 1
        %s229 = smul.addr %s228, 8
        %s230 = scalar_lea.vmem %s3, %s229
        %v231 = vld [vmem:[%s1] sm:$0xff]
        %v232 = vld [vmem:[%s198] sm:$0xff]
        %v233 = vld [vmem:[%s198 + $0x8] sm:$0xff]
        %v234 = vld [vmem:[%s198 + $0x10] sm:$0xff]
        %v235 = vld [vmem:[%s198 + $0x18] sm:$0xff]
        %v236 = vld [vmem:[%s198 + $0x20] sm:$0xff]
        %v237 = vld [vmem:[%s198 + $0x28] sm:$0xff]
        %v238 = vld [vmem:[%s198 + $0x30] sm:$0xff]
        %v239 = vld [vmem:[%s198 + $0x38] sm:$0xff]
        %v240 = vld [vmem:[%s198 + $0x40] sm:$0xff]
        %v241 = vld [vmem:[%s198 + $0x48] sm:$0xff]
        %v242 = vld [vmem:[%s198 + $0x50] sm:$0xff]
        %v243 = vld [vmem:[%s198 + $0x58] sm:$0xff]
        %v244 = vld [vmem:[%s198 + $0x60] sm:$0xff]
        %v245 = vld [vmem:[%s198 + $0x68] sm:$0xff]
        %v246 = vld [vmem:[%s198 + $0x70] sm:$0xff]
        %v247 = vld [vmem:[%s198 + $0x78] sm:$0xff]
        %vm248 = vcmask 261120
        %v250 = vsel %vm248, %v231, 0
        %252 = vmatprep.subr.mxu0 %v233
        %253 = vmatpush1.msra.mxu0 %v232
        %254 = vmatprep.subr.mxu0 %v237
        %255 = vmatpush1.msra.mxu0 %v236
        %256 = vmatprep.subr.mxu0 %v241
        %257 = vmatpush1.msra.mxu0 %v240
        %258 = vmatprep.subr.mxu0 %v245
        %259 = vmatpush1.msra.mxu0 %v244
        %260 = vmatprep.subr.mxu0 0.0
        %261 = vmatpush1.msra.mxu0 0.0
        %262 = vmatprep.subr.mxu0 0.0
        %263 = vmatpush1.msra.mxu0 0.0
        %264 = vmatprep.subr.mxu0 0.0
        %265 = vmatpush1.msra.mxu0 0.0
        %266 = vmatprep.subr.mxu0 0.0
        %267 = vmatpush1.msra.mxu0 0.0
        %268 = vmatprep.subr.mxu0 0.0
        %269 = vmatpush1.msra.mxu0 0.0
        %270 = vmatprep.subr.mxu0 0.0
        %271 = vmatpush1.msra.mxu0 0.0
        %272 = vmatprep.subr.mxu0 0.0
        %273 = vmatpush1.msra.mxu0 0.0
        %274 = vmatprep.subr.mxu0 0.0
        %275 = vmatpush1.msra.mxu0 0.0
        %276 = vmatprep.subr.mxu0 0.0
        %277 = vmatpush1.msra.mxu0 0.0
        %278 = vmatprep.subr.mxu0 0.0
        %279 = vmatpush1.msra.mxu0 0.0
        %280 = vmatprep.subr.mxu0 0.0
        %281 = vmatpush1.msra.mxu0 0.0
        %282 = vmatprep.subr.mxu0 0.0
        %283 = vmatpush1.msra.mxu0 0.0
        %284 = vmatprep.subr.mxu0 0.0
        %285 = vmatpush1.msra.mxu0 0.0
        %286 = vmatprep.subr.mxu0 0.0
        %287 = vmatpush1.msra.mxu0 0.0
        %288 = vmatprep.subr.mxu0 0.0
        %289 = vmatpush1.msra.mxu0 0.0
        %290 = vmatprep.subr.mxu0 0.0
        %291 = vmatpush1.msra.mxu0 0.0
        %292 = vmatprep.subr.mxu0 0.0
        %293 = vmatpush1.msra.mxu0 0.0
        %294 = vmatprep.subr.mxu0 0.0
        %295 = vmatpush1.msra.mxu0 0.0
        %296 = vmatprep.subr.mxu0 0.0
        %297 = vmatpush1.msra.mxu0 0.0
        %298 = vmatprep.subr.mxu0 0.0
        %299 = vmatpush1.msra.mxu0 0.0
        %300 = vmatprep.subr.mxu0 0.0
        %301 = vmatpush1.msra.mxu0 0.0
        %302 = vmatprep.subr.mxu0 0.0
        %303 = vmatpush1.msra.mxu0 0.0
        %304 = vmatprep.subr.mxu0 0.0
        %305 = vmatpush1.msra.mxu0 0.0
        %306 = vmatprep.subr.mxu0 0.0
        %307 = vmatpush1.msra.mxu0 0.0
        %308 = vmatprep.subr.mxu0 0.0
        %309 = vmatpush1.msra.mxu0 0.0
        %310 = vmatprep.subr.mxu0 0.0
        %311 = vmatpush1.msra.mxu0 0.0
        %312 = vmatprep.subr.mxu0 0.0
        %313 = vmatpush1.msra.mxu0 0.0
        %314 = vmatprep.subr.mxu0 0.0
        %315 = vmatpush1.msra.mxu0 0.0
        %316 = vmatprep.mubr.f32.mxu0 0.0
        %317 = vmatmul.mubr.f32.gmra.mrb[0].mxu0 %v250
        %v318 = vpop.f32.mrb[0].mxu0
        %v319 = vadd.f32 0.0, %v318
        %v320 = vpop.f32.mrb[0].mxu0
        %v321 = vadd.f32 0.0, %v320
        %322 = vdwg.mxu0
        %323 = vmatprep.subr.mxu0 %v235
        %324 = vmatpush1.msra.mxu0 %v234
        %325 = vmatprep.subr.mxu0 %v239
        %326 = vmatpush1.msra.mxu0 %v238
        %327 = vmatprep.subr.mxu0 %v243
        %328 = vmatpush1.msra.mxu0 %v242
        %329 = vmatprep.subr.mxu0 %v247
        %330 = vmatpush1.msra.mxu0 %v246
        %331 = vmatprep.subr.mxu0 0.0
        %332 = vmatpush1.msra.mxu0 0.0
        %333 = vmatprep.subr.mxu0 0.0
        %334 = vmatpush1.msra.mxu0 0.0
        %335 = vmatprep.subr.mxu0 0.0
        %336 = vmatpush1.msra.mxu0 0.0
        %337 = vmatprep.subr.mxu0 0.0
        %338 = vmatpush1.msra.mxu0 0.0
        %339 = vmatprep.subr.mxu0 0.0
        %340 = vmatpush1.msra.mxu0 0.0
        %341 = vmatprep.subr.mxu0 0.0
        %342 = vmatpush1.msra.mxu0 0.0
        %343 = vmatprep.subr.mxu0 0.0
        %344 = vmatpush1.msra.mxu0 0.0
        %345 = vmatprep.subr.mxu0 0.0
        %346 = vmatpush1.msra.mxu0 0.0
        %347 = vmatprep.subr.mxu0 0.0
        %348 = vmatpush1.msra.mxu0 0.0
        %349 = vmatprep.subr.mxu0 0.0
        %350 = vmatpush1.msra.mxu0 0.0
        %351 = vmatprep.subr.mxu0 0.0
        %352 = vmatpush1.msra.mxu0 0.0
        %353 = vmatprep.subr.mxu0 0.0
        %354 = vmatpush1.msra.mxu0 0.0
        %355 = vmatprep.subr.mxu0 0.0
        %356 = vmatpush1.msra.mxu0 0.0
        %357 = vmatprep.subr.mxu0 0.0
        %358 = vmatpush1.msra.mxu0 0.0
        %359 = vmatprep.subr.mxu0 0.0
        %360 = vmatpush1.msra.mxu0 0.0
        %361 = vmatprep.subr.mxu0 0.0
        %362 = vmatpush1.msra.mxu0 0.0
        %363 = vmatprep.subr.mxu0 0.0
        %364 = vmatpush1.msra.mxu0 0.0
        %365 = vmatprep.subr.mxu0 0.0
        %366 = vmatpush1.msra.mxu0 0.0
        %367 = vmatprep.subr.mxu0 0.0
        %368 = vmatpush1.msra.mxu0 0.0
        %369 = vmatprep.subr.mxu0 0.0
        %370 = vmatpush1.msra.mxu0 0.0
        %371 = vmatprep.subr.mxu0 0.0
        %372 = vmatpush1.msra.mxu0 0.0
        %373 = vmatprep.subr.mxu0 0.0
        %374 = vmatpush1.msra.mxu0 0.0
        %375 = vmatprep.subr.mxu0 0.0
        %376 = vmatpush1.msra.mxu0 0.0
        %377 = vmatprep.subr.mxu0 0.0
        %378 = vmatpush1.msra.mxu0 0.0
        %379 = vmatprep.subr.mxu0 0.0
        %380 = vmatpush1.msra.mxu0 0.0
        %381 = vmatprep.subr.mxu0 0.0
        %382 = vmatpush1.msra.mxu0 0.0
        %383 = vmatprep.subr.mxu0 0.0
        %384 = vmatpush1.msra.mxu0 0.0
        %385 = vmatprep.subr.mxu0 0.0
        %386 = vmatpush1.msra.mxu0 0.0
        %387 = vmatprep.mubr.f32.mxu0 0.0
        %388 = vmatmul.mubr.f32.gmra.mrb[0].mxu0 %v250
        %v389 = vpop.f32.mrb[0].mxu0
        %v390 = vadd.f32 0.0, %v389
        %v391 = vpop.f32.mrb[0].mxu0
        %v392 = vadd.f32 0.0, %v391
        %393 = vdwg.mxu0
        %v394 = vadd.f32 %v319, %v321
        %v395 = vadd.f32 %v394, %v390
        %v396 = vadd.f32 %v395, %v392
        %397 = vadd.xlane.f32.xlu0 %v396
        %v398 = vpop.xlane.xlu0 %397
        %vm399 = vcmask 7168
        %400 = vst.msk [vmem:[%s226] sm:$0xff] %vm399, %v398
        %v401 = vmul.f32 %v319, %v319
        %v402 = vmul.f32 %v321, %v321
        %v403 = vmul.f32 %v390, %v390
        %v404 = vmul.f32 %v392, %v392
        %v405 = vadd.f32 %v401, %v402
        %v406 = vadd.f32 %v405, %v403
        %v407 = vadd.f32 %v406, %v404
        %408 = vadd.xlane.f32.xlu0 %v407
        %v409 = vpop.xlane.xlu0 %408
        %410 = vst.msk [vmem:[%s230] sm:$0xff] %vm399, %v409
        %p411 = scmp.lt.s32.totalorder %s15, 1
        %s412 = scalar_select %p411, %s15, 1
        %s413 = smul.addr %s412, 8
        %s414 = scalar_lea.vmem %s2, %s413
        %p415 = scmp.lt.s32.totalorder %s15, 1
        %s416 = scalar_select %p415, %s15, 1
        %s417 = smul.addr %s416, 8
        %s418 = scalar_lea.vmem %s3, %s417
        // Predicated region
        $region52: #{basic_convolution_block_down.2} parent=46 // pred_check
          %p419 = pneg %p80
        $region53: #{basic_convolution_block_down.2} parent=46 // pred_check_branch
          %421 = sbr.rel (%p419) target = $region55
        $region54: #{basic_convolution_block_down.2} parent=46 // pred_region
          _
        $region55: #{basic_convolution_block_down.2} parent=46 // pred_fallthru
          _
        // Predicated region
        $region56: #{basic_convolution_block_down.2} parent=46 // pred_check
          %p422 = pneg %p106
        $region57: #{basic_convolution_block_down.2} parent=46 // pred_check_branch
          %424 = sbr.rel (%p422) target = $region59
        $region58: #{basic_convolution_block_down.2} parent=46 // pred_region
          _
        $region59: #{basic_convolution_block_down.2} parent=46 // pred_fallthru
          _
      $region47: #{basic_convolution_block_down.2} parent=5 // pred_fallthru
        _
      %p425 = scmp.le.s32.totalorder 2, %s10
      // Predicated region
      $region60: #{basic_convolution_block_down.2} parent=5 // pred_check
        %p426 = pneg %p425
      $region61: #{basic_convolution_block_down.2} parent=5 // pred_check_branch
        %428 = sbr.rel (%p426) target = $region63
      $region62: #{basic_convolution_block_down.2} parent=5 // pred_region
        %s429 = ssub.s32 %s10, 2
        // Predicated region
        $region64: #{basic_convolution_block_down.2} parent=62 // pred_check
          %p430 = pneg %p86
        $region65: #{basic_convolution_block_down.2} parent=62 // pred_check_branch
          %432 = sbr.rel (%p430) target = $region67
        $region66: #{basic_convolution_block_down.2} parent=62 // pred_region
          %p433 = scmp.lt.s32.totalorder %s16, 1
          %s434 = scalar_select %p433, %s16, 1
          %s435 = smul.addr %s434, 8
          %s436 = scalar_lea.vmem %s2, %s435
        $region67: #{basic_convolution_block_down.2} parent=62 // pred_fallthru
          _
        // Predicated region
        $region68: #{basic_convolution_block_down.2} parent=62 // pred_check
          %p437 = pneg %p112
        $region69: #{basic_convolution_block_down.2} parent=62 // pred_check_branch
          %439 = sbr.rel (%p437) target = $region71
        $region70: #{basic_convolution_block_down.2} parent=62 // pred_region
          %p440 = scmp.lt.s32.totalorder %s16, 1
          %s441 = scalar_select %p440, %s16, 1
          %s442 = smul.addr %s441, 8
          %s443 = scalar_lea.vmem %s3, %s442
        $region71: #{basic_convolution_block_down.2} parent=62 // pred_fallthru
          _
      $region63: #{basic_convolution_block_down.2} parent=5 // pred_fallthru
        _
    $region6: #{basic_convolution_block_down.2} parent=1 // loop_footer
      %s14 = sadd.s32 1, %s10
    $region7: #{basic_convolution_block_down.2} parent=1 // loop_footer_branch
      %9 = sbr.rel target = $region3
    $region8: #{basic_convolution_block_down.2} parent=1 // loop_exit
      _

// kernel: basic_convolution_block_down.3
$region0: #{basic_convolution_block_down.3}
  #allocation0 [shape = 'u32[]', space=smem, size = 0x4, offset = 0x4, fixed_abs, tag = 'smem constant byte address 0x4 - core index']
  #allocation1 [shape = 'u32[144,128]{1,0:T(1,128)}', space=vmem, size = 0x12000, scoped, tag = 'internal scratch']
  %s0 = inlined_call_operand.vmem [shape: f32[32,1024], index: 0, kind: input, shape index: {}]
  %s1 = inlined_call_operand.vmem [shape: f32[8,32], index: 1, kind: input, shape index: {}]
  %s2 = inlined_call_operand.vmem [shape: f32[8,1], index: 2, kind: input, shape index: {}]
  %s3 = inlined_call_operand.vmem [shape: f32[8,1], index: 3, kind: input, shape index: {}]
  %s4 = inlined_call_operand.vmem [shape: f32[8,1024], index: 4, kind: output, shape index: {}]
  %s5 = sld [smem:[#allocation0]]
  $region72: #{basic_convolution_block_down.3} parent=0
    _
  %s7 = ssub.s32 1, %s5
  %s8 = scalar_select 0, %s7, %s5
  $region1: #{basic_convolution_block_down.3} parent=0
    #allocation2 [shape = 'u8[131072]{0}', space=vmem, size = 0x20000, scoped, tag = 'input window, operand 0']
    loop: start=0, step=1, limit=4
    $region2: #{basic_convolution_block_down.3} parent=1 // loop_pre_header
      _
    $region3: #{basic_convolution_block_down.3} parent=1 // loop_header
      %s10 = sphi 0, %s14
      %p11 = scmp.ge.s32.totalorder %s10, 4
      %s20 = sphi 0, %s22
      %s23 = sphi 0, %s20
      %s24 = sphi 0, %s23
      %s40 = sphi 0, %s24
      %s44 = sphi 0, %s44
      %s46 = sphi 0, %s44
      %s47 = sphi 0, %s46
      %s61 = sphi 0, %s47
      %s65 = sphi 0, %s65
      %s67 = sphi 0, %s65
      %s68 = sphi 0, %s67
      %s82 = sphi 0, %s68
      %s86 = sphi 0, %s86
      %s88 = sphi 0, %s86
      %s89 = sphi 0, %s88
      %s103 = sphi 0, %s89
      %s109 = sphi 0, %s111
      %s112 = sphi 0, %s109
      %s113 = sphi 0, %s112
      %s129 = sphi 0, %s113
    $region4: #{basic_convolution_block_down.3} parent=1 // loop_header_branch
      %13 = sbr.rel (%p11) target = $region8
    $region5: #{basic_convolution_block_down.3} parent=1 // loop_body
      %s15 = ssub.s32 %s10, 1
      %s16 = ssub.s32 %s10, 2
      %s17 = sadd.s32 %s10, 1
      %s18 = ssub.s32 %s10, %s17
      %p19 = scmp.eq.s32.totalorder %s18, 0
      %s21 = sadd.s32 %s20, 1
      %s22 = scalar_select %p19, %s20, %s21
      %p25 = pneg %p19
      %p26 = scmp.eq.s32.totalorder %s10, 1
      %p27 = por %p25, %p26
      %p28 = scmp.ne.s32.totalorder %s20, %s23
      %p29 = scmp.eq.s32.totalorder %s10, 0
      %p30 = por %p28, %p29
      %p31 = scmp.ne.s32.totalorder %s20, %s23
      %p32 = scmp.eq.s32.totalorder %s15, 1
      %p33 = por %p31, %p32
      %p34 = scmp.ne.s32.totalorder %s23, %s24
      %p35 = scmp.eq.s32.totalorder %s15, 0
      %p36 = por %p34, %p35
      %p37 = scmp.ne.s32.totalorder %s23, %s24
      %p38 = scmp.eq.s32.totalorder %s16, 1
      %p39 = por %p37, %p38
      %p41 = scmp.ne.s32.totalorder %s24, %s40
      %p42 = scmp.eq.s32.totalorder %s16, 0
      %p43 = por %p41, %p42
      %s45 = sadd.s32 %s44, 1
      %p48 = scmp.eq.s32.totalorder %s10, 1
      %p49 = scmp.ne.s32.totalorder %s44, %s46
      %p50 = scmp.eq.s32.totalorder %s10, 0
      %p51 = por %p49, %p50
      %p52 = scmp.ne.s32.totalorder %s44, %s46
      %p53 = scmp.eq.s32.totalorder %s15, 1
      %p54 = por %p52, %p53
      %p55 = scmp.ne.s32.totalorder %s46, %s47
      %p56 = scmp.eq.s32.totalorder %s15, 0
      %p57 = por %p55, %p56
      %p58 = scmp.ne.s32.totalorder %s46, %s47
      %p59 = scmp.eq.s32.totalorder %s16, 1
      %p60 = por %p58, %p59
      %p62 = scmp.ne.s32.totalorder %s47, %s61
      %p63 = scmp.eq.s32.totalorder %s16, 0
      %p64 = por %p62, %p63
      %s66 = sadd.s32 %s65, 1
      %p69 = scmp.eq.s32.totalorder %s10, 1
      %p70 = scmp.ne.s32.totalorder %s65, %s67
      %p71 = scmp.eq.s32.totalorder %s10, 0
      %p72 = por %p70, %p71
      %p73 = scmp.ne.s32.totalorder %s65, %s67
      %p74 = scmp.eq.s32.totalorder %s15, 1
      %p75 = por %p73, %p74
      %p76 = scmp.ne.s32.totalorder %s67, %s68
      %p77 = scmp.eq.s32.totalorder %s15, 0
      %p78 = por %p76, %p77
      %p79 = scmp.ne.s32.totalorder %s67, %s68
      %p80 = scmp.eq.s32.totalorder %s16, 1
      %p81 = por %p79, %p80
      %p83 = scmp.ne.s32.totalorder %s68, %s82
      %p84 = scmp.eq.s32.totalorder %s16, 0
      %p85 = por %p83, %p84
      %s87 = sadd.s32 %s86, 1
      %p90 = scmp.eq.s32.totalorder %s10, 1
      %p91 = scmp.ne.s32.totalorder %s86, %s88
      %p92 = scmp.eq.s32.totalorder %s10, 0
      %p93 = por %p91, %p92
      %p94 = scmp.ne.s32.totalorder %s86, %s88
      %p95 = scmp.eq.s32.totalorder %s15, 1
      %p96 = por %p94, %p95
      %p97 = scmp.ne.s32.totalorder %s88, %s89
      %p98 = scmp.eq.s32.totalorder %s15, 0
      %p99 = por %p97, %p98
      %p100 = scmp.ne.s32.totalorder %s88, %s89
      %p101 = scmp.eq.s32.totalorder %s16, 1
      %p102 = por %p100, %p101
      %p104 = scmp.ne.s32.totalorder %s89, %s103
      %p105 = scmp.eq.s32.totalorder %s16, 0
      %p106 = por %p104, %p105
      %s107 = ssub.s32 %s10, %s17
      %p108 = scmp.eq.s32.totalorder %s107, 0
      %s110 = sadd.s32 %s109, 1
      %s111 = scalar_select %p108, %s109, %s110
      %p114 = pneg %p108
      %p115 = scmp.eq.s32.totalorder %s10, 1
      %p116 = por %p114, %p115
      %p117 = scmp.ne.s32.totalorder %s109, %s112
      %p118 = scmp.eq.s32.totalorder %s10, 0
      %p119 = por %p117, %p118
      %p120 = scmp.ne.s32.totalorder %s109, %s112
      %p121 = scmp.eq.s32.totalorder %s15, 1
      %p122 = por %p120, %p121
      %p123 = scmp.ne.s32.totalorder %s112, %s113
      %p124 = scmp.eq.s32.totalorder %s15, 0
      %p125 = por %p123, %p124
      %p126 = scmp.ne.s32.totalorder %s112, %s113
      %p127 = scmp.eq.s32.totalorder %s16, 1
      %p128 = por %p126, %p127
      %p130 = scmp.ne.s32.totalorder %s113, %s129
      %p131 = scmp.eq.s32.totalorder %s16, 0
      %p132 = por %p130, %p131
      %p133 = scmp.le.s32.totalorder 1, %s10
      %p134 = scmp.lt.s32.totalorder %s10, 3
      %p135 = pnand %p133, %p134
      %p136 = pneg %p135
      // Predicated region
      $region9: #{basic_convolution_block_down.3} parent=5 // pred_check
        _
      $region10: #{basic_convolution_block_down.3} parent=5 // pred_check_branch
        %138 = sbr.rel (%p135) target = $region12
      $region11: #{basic_convolution_block_down.3} parent=5 // pred_region
        %s139 = ssub.s32 %s10, 1
        // Predicated region
        $region13: #{basic_convolution_block_down.3} parent=11 // pred_check
          %p140 = pneg %p57
        $region14: #{basic_convolution_block_down.3} parent=11 // pred_check_branch
          %142 = sbr.rel (%p140) target = $region16
        $region15: #{basic_convolution_block_down.3} parent=11 // pred_region
          _
        $region16: #{basic_convolution_block_down.3} parent=11 // pred_fallthru
          _
        // Predicated region
        $region17: #{basic_convolution_block_down.3} parent=11 // pred_check
          %p143 = pneg %p78
        $region18: #{basic_convolution_block_down.3} parent=11 // pred_check_branch
          %145 = sbr.rel (%p143) target = $region20
        $region19: #{basic_convolution_block_down.3} parent=11 // pred_region
          _
        $region20: #{basic_convolution_block_down.3} parent=11 // pred_fallthru
          _
        // Predicated region
        $region21: #{basic_convolution_block_down.3} parent=11 // pred_check
          %p146 = pneg %p99
        $region22: #{basic_convolution_block_down.3} parent=11 // pred_check_branch
          %148 = sbr.rel (%p146) target = $region24
        $region23: #{basic_convolution_block_down.3} parent=11 // pred_region
          _
        $region24: #{basic_convolution_block_down.3} parent=11 // pred_fallthru
          _
      $region12: #{basic_convolution_block_down.3} parent=5 // pred_fallthru
        _
      %p149 = scmp.lt.s32.totalorder %s10, 2
      // Predicated region
      $region25: #{basic_convolution_block_down.3} parent=5 // pred_check
        %p150 = pneg %p149
      $region26: #{basic_convolution_block_down.3} parent=5 // pred_check_branch
        %152 = sbr.rel (%p150) target = $region28
      $region27: #{basic_convolution_block_down.3} parent=5 // pred_region
        // Predicated region
        $region29: #{basic_convolution_block_down.3} parent=27 // pred_check
          %p153 = pneg %p30
        $region30: #{basic_convolution_block_down.3} parent=27 // pred_check_branch
          %155 = sbr.rel (%p153) target = $region32
        $region31: #{basic_convolution_block_down.3} parent=27 // pred_region
          %s156 = sand.u32 %s20, 1
          %s157 = sand.u32 %s20, 1
          %s158 = smul.addr %s157, 128
          %s159 = scalar_lea.vmem [#allocation2], %s158
          %s160 = smul.u32 4, %s10
          %s161 = smul.addr %s160, 8
          %s162 = scalar_lea.vmem %s0, %s161
          // Predicated region
          $region33: #{basic_convolution_block_down.3} parent=31 // pred_check
            _
          $region34: #{basic_convolution_block_down.3} parent=31 // pred_check_branch
            %164 = sbr.rel (0) target = $region36
          $region35: #{basic_convolution_block_down.3} parent=31 // pred_region
            // Predicated region
            $region37: #{basic_convolution_block_down.3} parent=35 // pred_check
              _
            $region38: #{basic_convolution_block_down.3} parent=35 // pred_check_branch
              %166 = sbr.rel (0) target = $region40
            $region39: #{basic_convolution_block_down.3} parent=35 // pred_region
              loop: start=0, step=1, limit=1
              $region41: #{basic_convolution_block_down.3} parent=39 // loop_pre_header
                _
              $region42: #{basic_convolution_block_down.3} parent=39 // loop_header
                %s168 = sphi 0, %s172
                %p169 = scmp.ge.s32.totalorder %s168, 1
                %s173 = sphi %s162, %s162
                %s174 = sphi %s159, %s159
              $region43: #{basic_convolution_block_down.3} parent=39 // loop_header_branch
                %171 = sbr.rel (%p169) target = $region47
              $region44: #{basic_convolution_block_down.3} parent=39 // loop_body
                %v175 = vld [vmem:[%s173] sm:$0xff]
                %176 = vst [vmem:[%s174] sm:$0xff] %v175
                %v177 = vld [vmem:[%s173 + $0x8] sm:$0xff]
                %178 = vst [vmem:[%s174 + $0x8] sm:$0xff] %v177
                %v179 = vld [vmem:[%s173 + $0x10] sm:$0xff]
                %180 = vst [vmem:[%s174 + $0x10] sm:$0xff] %v179
                %v181 = vld [vmem:[%s173 + $0x18] sm:$0xff]
                %182 = vst [vmem:[%s174 + $0x18] sm:$0xff] %v181
                %v183 = vld [vmem:[%s173 + $0x40] sm:$0xff]
                %184 = vst [vmem:[%s174 + $0x20] sm:$0xff] %v183
                %v185 = vld [vmem:[%s173 + $0x48] sm:$0xff]
                %186 = vst [vmem:[%s174 + $0x28] sm:$0xff] %v185
                %v187 = vld [vmem:[%s173 + $0x50] sm:$0xff]
                %188 = vst [vmem:[%s174 + $0x30] sm:$0xff] %v187
                %v189 = vld [vmem:[%s173 + $0x58] sm:$0xff]
                %190 = vst [vmem:[%s174 + $0x38] sm:$0xff] %v189
                %v191 = vld [vmem:[%s173 + $0x80] sm:$0xff]
                %192 = vst [vmem:[%s174 + $0x40] sm:$0xff] %v191
                %v193 = vld [vmem:[%s173 + $0x88] sm:$0xff]
                %194 = vst [vmem:[%s174 + $0x48] sm:$0xff] %v193
                %v195 = vld [vmem:[%s173 + $0x90] sm:$0xff]
                %196 = vst [vmem:[%s174 + $0x50] sm:$0xff] %v195
                %v197 = vld [vmem:[%s173 + $0x98] sm:$0xff]
                %198 = vst [vmem:[%s174 + $0x58] sm:$0xff] %v197
                %v199 = vld [vmem:[%s173 + $0xc0] sm:$0xff]
                %200 = vst [vmem:[%s174 + $0x60] sm:$0xff] %v199
                %v201 = vld [vmem:[%s173 + $0xc8] sm:$0xff]
                %202 = vst [vmem:[%s174 + $0x68] sm:$0xff] %v201
                %v203 = vld [vmem:[%s173 + $0xd0] sm:$0xff]
                %204 = vst [vmem:[%s174 + $0x70] sm:$0xff] %v203
                %v205 = vld [vmem:[%s173 + $0xd8] sm:$0xff]
                %206 = vst [vmem:[%s174 + $0x78] sm:$0xff] %v205
              $region45: #{basic_convolution_block_down.3} parent=39 // loop_footer
                %s172 = sadd.s32 1, %s168
              $region46: #{basic_convolution_block_down.3} parent=39 // loop_footer_branch
                %167 = sbr.rel target = $region42
              $region47: #{basic_convolution_block_down.3} parent=39 // loop_exit
                _
            $region40: #{basic_convolution_block_down.3} parent=35 // pred_fallthru
              _
            // Predicated region
            $region48: #{basic_convolution_block_down.3} parent=35 // pred_check
              _
            $region49: #{basic_convolution_block_down.3} parent=35 // pred_check_branch
              %208 = sbr.rel target = $region51
            $region50: #{basic_convolution_block_down.3} parent=35 // pred_region
              _
            $region51: #{basic_convolution_block_down.3} parent=35 // pred_fallthru
              _
          $region36: #{basic_convolution_block_down.3} parent=31 // pred_fallthru
            _
          %209 = vnop
        $region32: #{basic_convolution_block_down.3} parent=27 // pred_fallthru
          _
      $region28: #{basic_convolution_block_down.3} parent=5 // pred_fallthru
        _
      %p210 = scmp.le.s32.totalorder 1, %s10
      %p211 = scmp.lt.s32.totalorder %s10, 3
      %p212 = pnand %p210, %p211
      %p213 = pneg %p212
      // Predicated region
      $region52: #{basic_convolution_block_down.3} parent=5 // pred_check
        _
      $region53: #{basic_convolution_block_down.3} parent=5 // pred_check_branch
        %215 = sbr.rel (%p212) target = $region55
      $region54: #{basic_convolution_block_down.3} parent=5 // pred_region
        %s216 = ssub.s32 %s10, 1
        %s217 = sand.u32 %s23, 1
        %s218 = sand.u32 %s23, 1
        %s219 = smul.addr %s218, 128
        %s220 = scalar_lea.vmem [#allocation2], %s219
        // Predicated region
        $region56: #{basic_convolution_block_down.3} parent=54 // pred_check
          %p221 = pneg %p36
        $region57: #{basic_convolution_block_down.3} parent=54 // pred_check_branch
          %223 = sbr.rel (%p221) target = $region59
        $region58: #{basic_convolution_block_down.3} parent=54 // pred_region
          _
        $region59: #{basic_convolution_block_down.3} parent=54 // pred_fallthru
          _
        %s224 = sand.u32 %s23, 1
        %s225 = sand.u32 %s23, 1
        %s226 = smul.addr %s225, 128
        %s227 = scalar_lea.vmem [#allocation2], %s226
        %p228 = pneg %p36
        %p229 = pneg %p33
        %p230 = pneg %p57
        %p231 = pneg %p54
        %p232 = pneg %p78
        %p233 = pneg %p75
        %p234 = pneg %p99
        %p235 = pneg %p96
        %p236 = pneg %p125
        %p237 = pneg %p122
        %s238 = smul.u32 4, %s15
        %p239 = scmp.lt.s32.totalorder %s238, 7
        %s240 = scalar_select %p239, %s238, 7
        %s241 = smul.addr %s240, 8
        %s242 = scalar_lea.vmem %s4, %s241
        %s243 = smul.u32 4, %s15
        %s244 = smul.u32 4, %s15
        %p245 = scmp.lt.s32.totalorder %s244, 7
        %s246 = scalar_select %p245, %s244, 7
        %s247 = smul.addr %s246, 8
        %s248 = scalar_lea.vmem %s4, %s247
        %s249 = smul.u32 4, %s15
        %v250 = vld [vmem:[%s1] sm:$0xff]
        %v251 = vld [vmem:[%s220] sm:$0xff]
        %v252 = vld [vmem:[%s220 + $0x8] sm:$0xff]
        %v253 = vld [vmem:[%s220 + $0x10] sm:$0xff]
        %v254 = vld [vmem:[%s220 + $0x18] sm:$0xff]
        %v255 = vld [vmem:[%s220 + $0x20] sm:$0xff]
        %v256 = vld [vmem:[%s220 + $0x28] sm:$0xff]
        %v257 = vld [vmem:[%s220 + $0x30] sm:$0xff]
        %v258 = vld [vmem:[%s220 + $0x38] sm:$0xff]
        %v259 = vld [vmem:[%s220 + $0x40] sm:$0xff]
        %v260 = vld [vmem:[%s220 + $0x48] sm:$0xff]
        %v261 = vld [vmem:[%s220 + $0x50] sm:$0xff]
        %v262 = vld [vmem:[%s220 + $0x58] sm:$0xff]
        %v263 = vld [vmem:[%s220 + $0x60] sm:$0xff]
        %v264 = vld [vmem:[%s220 + $0x68] sm:$0xff]
        %v265 = vld [vmem:[%s220 + $0x70] sm:$0xff]
        %v266 = vld [vmem:[%s220 + $0x78] sm:$0xff]
        %vm267 = vcmask 261120
        %v269 = vsel %vm267, %v250, 0
        %271 = vmatprep.subr.mxu0 %v252
        %272 = vmatpush1.msra.mxu0 %v251
        %273 = vmatprep.subr.mxu0 %v256
        %274 = vmatpush1.msra.mxu0 %v255
        %275 = vmatprep.subr.mxu0 %v260
        %276 = vmatpush1.msra.mxu0 %v259
        %277 = vmatprep.subr.mxu0 %v264
        %278 = vmatpush1.msra.mxu0 %v263
        %279 = vmatprep.subr.mxu0 0.0
        %280 = vmatpush1.msra.mxu0 0.0
        %281 = vmatprep.subr.mxu0 0.0
        %282 = vmatpush1.msra.mxu0 0.0
        %283 = vmatprep.subr.mxu0 0.0
        %284 = vmatpush1.msra.mxu0 0.0
        %285 = vmatprep.subr.mxu0 0.0
        %286 = vmatpush1.msra.mxu0 0.0
        %287 = vmatprep.subr.mxu0 0.0
        %288 = vmatpush1.msra.mxu0 0.0
        %289 = vmatprep.subr.mxu0 0.0
        %290 = vmatpush1.msra.mxu0 0.0
        %291 = vmatprep.subr.mxu0 0.0
        %292 = vmatpush1.msra.mxu0 0.0
        %293 = vmatprep.subr.mxu0 0.0
        %294 = vmatpush1.msra.mxu0 0.0
        %295 = vmatprep.subr.mxu0 0.0
        %296 = vmatpush1.msra.mxu0 0.0
        %297 = vmatprep.subr.mxu0 0.0
        %298 = vmatpush1.msra.mxu0 0.0
        %299 = vmatprep.subr.mxu0 0.0
        %300 = vmatpush1.msra.mxu0 0.0
        %301 = vmatprep.subr.mxu0 0.0
        %302 = vmatpush1.msra.mxu0 0.0
        %303 = vmatprep.subr.mxu0 0.0
        %304 = vmatpush1.msra.mxu0 0.0
        %305 = vmatprep.subr.mxu0 0.0
        %306 = vmatpush1.msra.mxu0 0.0
        %307 = vmatprep.subr.mxu0 0.0
        %308 = vmatpush1.msra.mxu0 0.0
        %309 = vmatprep.subr.mxu0 0.0
        %310 = vmatpush1.msra.mxu0 0.0
        %311 = vmatprep.subr.mxu0 0.0
        %312 = vmatpush1.msra.mxu0 0.0
        %313 = vmatprep.subr.mxu0 0.0
        %314 = vmatpush1.msra.mxu0 0.0
        %315 = vmatprep.subr.mxu0 0.0
        %316 = vmatpush1.msra.mxu0 0.0
        %317 = vmatprep.subr.mxu0 0.0
        %318 = vmatpush1.msra.mxu0 0.0
        %319 = vmatprep.subr.mxu0 0.0
        %320 = vmatpush1.msra.mxu0 0.0
        %321 = vmatprep.subr.mxu0 0.0
        %322 = vmatpush1.msra.mxu0 0.0
        %323 = vmatprep.subr.mxu0 0.0
        %324 = vmatpush1.msra.mxu0 0.0
        %325 = vmatprep.subr.mxu0 0.0
        %326 = vmatpush1.msra.mxu0 0.0
        %327 = vmatprep.subr.mxu0 0.0
        %328 = vmatpush1.msra.mxu0 0.0
        %329 = vmatprep.subr.mxu0 0.0
        %330 = vmatpush1.msra.mxu0 0.0
        %331 = vmatprep.subr.mxu0 0.0
        %332 = vmatpush1.msra.mxu0 0.0
        %333 = vmatprep.subr.mxu0 0.0
        %334 = vmatpush1.msra.mxu0 0.0
        %335 = vmatprep.mubr.f32.mxu0 0.0
        %336 = vmatmul.mubr.f32.gmra.mrb[0].mxu0 %v269
        %v337 = vpop.f32.mrb[0].mxu0
        %v338 = vadd.f32 0.0, %v337
        %v339 = vpop.f32.mrb[0].mxu0
        %v340 = vadd.f32 0.0, %v339
        %341 = vdwg.mxu0
        %342 = vmatprep.subr.mxu0 %v254
        %343 = vmatpush1.msra.mxu0 %v253
        %344 = vmatprep.subr.mxu0 %v258
        %345 = vmatpush1.msra.mxu0 %v257
        %346 = vmatprep.subr.mxu0 %v262
        %347 = vmatpush1.msra.mxu0 %v261
        %348 = vmatprep.subr.mxu0 %v266
        %349 = vmatpush1.msra.mxu0 %v265
        %350 = vmatprep.subr.mxu0 0.0
        %351 = vmatpush1.msra.mxu0 0.0
        %352 = vmatprep.subr.mxu0 0.0
        %353 = vmatpush1.msra.mxu0 0.0
        %354 = vmatprep.subr.mxu0 0.0
        %355 = vmatpush1.msra.mxu0 0.0
        %356 = vmatprep.subr.mxu0 0.0
        %357 = vmatpush1.msra.mxu0 0.0
        %358 = vmatprep.subr.mxu0 0.0
        %359 = vmatpush1.msra.mxu0 0.0
        %360 = vmatprep.subr.mxu0 0.0
        %361 = vmatpush1.msra.mxu0 0.0
        %362 = vmatprep.subr.mxu0 0.0
        %363 = vmatpush1.msra.mxu0 0.0
        %364 = vmatprep.subr.mxu0 0.0
        %365 = vmatpush1.msra.mxu0 0.0
        %366 = vmatprep.subr.mxu0 0.0
        %367 = vmatpush1.msra.mxu0 0.0
        %368 = vmatprep.subr.mxu0 0.0
        %369 = vmatpush1.msra.mxu0 0.0
        %370 = vmatprep.subr.mxu0 0.0
        %371 = vmatpush1.msra.mxu0 0.0
        %372 = vmatprep.subr.mxu0 0.0
        %373 = vmatpush1.msra.mxu0 0.0
        %374 = vmatprep.subr.mxu0 0.0
        %375 = vmatpush1.msra.mxu0 0.0
        %376 = vmatprep.subr.mxu0 0.0
        %377 = vmatpush1.msra.mxu0 0.0
        %378 = vmatprep.subr.mxu0 0.0
        %379 = vmatpush1.msra.mxu0 0.0
        %380 = vmatprep.subr.mxu0 0.0
        %381 = vmatpush1.msra.mxu0 0.0
        %382 = vmatprep.subr.mxu0 0.0
        %383 = vmatpush1.msra.mxu0 0.0
        %384 = vmatprep.subr.mxu0 0.0
        %385 = vmatpush1.msra.mxu0 0.0
        %386 = vmatprep.subr.mxu0 0.0
        %387 = vmatpush1.msra.mxu0 0.0
        %388 = vmatprep.subr.mxu0 0.0
        %389 = vmatpush1.msra.mxu0 0.0
        %390 = vmatprep.subr.mxu0 0.0
        %391 = vmatpush1.msra.mxu0 0.0
        %392 = vmatprep.subr.mxu0 0.0
        %393 = vmatpush1.msra.mxu0 0.0
        %394 = vmatprep.subr.mxu0 0.0
        %395 = vmatpush1.msra.mxu0 0.0
        %396 = vmatprep.subr.mxu0 0.0
        %397 = vmatpush1.msra.mxu0 0.0
        %398 = vmatprep.subr.mxu0 0.0
        %399 = vmatpush1.msra.mxu0 0.0
        %400 = vmatprep.subr.mxu0 0.0
        %401 = vmatpush1.msra.mxu0 0.0
        %402 = vmatprep.subr.mxu0 0.0
        %403 = vmatpush1.msra.mxu0 0.0
        %404 = vmatprep.subr.mxu0 0.0
        %405 = vmatpush1.msra.mxu0 0.0
        %406 = vmatprep.mubr.f32.mxu0 0.0
        %407 = vmatmul.mubr.f32.gmra.mrb[0].mxu0 %v269
        %v408 = vpop.f32.mrb[0].mxu0
        %v409 = vadd.f32 0.0, %v408
        %v410 = vpop.f32.mrb[0].mxu0
        %v411 = vadd.f32 0.0, %v410
        %412 = vdwg.mxu0
        %v413 = vld [vmem:[%s2] sm:$0xff]
        %415 = vset.pattern.permute.xlu0 0
        %416 = vperm.xlu0 %415, %v413
        %v417 = vpop.permute.xlu0 %416
        %v419 = vmul.f32 %v338, %v417
        %v420 = vmul.f32 %v340, %v417
        %v421 = vmul.f32 %v409, %v417
        %v422 = vmul.f32 %v411, %v417
        %v423 = vld [vmem:[%s3] sm:$0xff]
        %425 = vset.pattern.permute.xlu0 0
        %426 = vperm.xlu0 %425, %v423
        %v427 = vpop.permute.xlu0 %426
        %v429 = vadd.f32 %v419, %v427
        %v430 = vadd.f32 %v420, %v427
        %v431 = vadd.f32 %v421, %v427
        %v432 = vadd.f32 %v422, %v427
        %433 = vst [vmem:[%s248] sm:$0xff] %v429
        %434 = vst [vmem:[%s248 + $0x8] sm:$0xff] %v430
        %435 = vst [vmem:[%s248 + $0x10] sm:$0xff] %v431
        %436 = vst [vmem:[%s248 + $0x18] sm:$0xff] %v432
        %s437 = smul.u32 4, %s15
        %p438 = scmp.lt.s32.totalorder %s437, 7
        %s439 = scalar_select %p438, %s437, 7
        %s440 = smul.addr %s439, 8
        %s441 = scalar_lea.vmem %s4, %s440
        // Predicated region
        $region60: #{basic_convolution_block_down.3} parent=54 // pred_check
          %p442 = pneg %p122
        $region61: #{basic_convolution_block_down.3} parent=54 // pred_check_branch
          %444 = sbr.rel (%p442) target = $region63
        $region62: #{basic_convolution_block_down.3} parent=54 // pred_region
          %s445 = smul.u32 4, %s15
        $region63: #{basic_convolution_block_down.3} parent=54 // pred_fallthru
          _
      $region55: #{basic_convolution_block_down.3} parent=5 // pred_fallthru
        _
      %p446 = scmp.le.s32.totalorder 2, %s10
      // Predicated region
      $region64: #{basic_convolution_block_down.3} parent=5 // pred_check
        %p447 = pneg %p446
      $region65: #{basic_convolution_block_down.3} parent=5 // pred_check_branch
        %449 = sbr.rel (%p447) target = $region67
      $region66: #{basic_convolution_block_down.3} parent=5 // pred_region
        %s450 = ssub.s32 %s10, 2
        // Predicated region
        $region68: #{basic_convolution_block_down.3} parent=66 // pred_check
          %p451 = pneg %p128
        $region69: #{basic_convolution_block_down.3} parent=66 // pred_check_branch
          %453 = sbr.rel (%p451) target = $region71
        $region70: #{basic_convolution_block_down.3} parent=66 // pred_region
          %s454 = smul.u32 4, %s16
          %p455 = scmp.lt.s32.totalorder %s454, 7
          %s456 = scalar_select %p455, %s454, 7
          %s457 = smul.addr %s456, 8
          %s458 = scalar_lea.vmem %s4, %s457
        $region71: #{basic_convolution_block_down.3} parent=66 // pred_fallthru
          _
      $region67: #{basic_convolution_block_down.3} parent=5 // pred_fallthru
        _
    $region6: #{basic_convolution_block_down.3} parent=1 // loop_footer
      %s14 = sadd.s32 1, %s10
    $region7: #{basic_convolution_block_down.3} parent=1 // loop_footer_branch
      %9 = sbr.rel target = $region3
    $region8: #{basic_convolution_block_down.3} parent=1 // loop_exit
      _

</llo_original>
